<compile_context>
chip_gen: v7x
topology: tpu7x:2x2x1
jax: 0.10.0
libtpu: 0.0.40
codegen_flags: <defaults>
</compile_context>

<pallas_src>
import jax
import jax.numpy as jnp
from jax.experimental import pallas as pl
from jax.experimental.pallas import tpu as pltpu

_LANE = 128      # vreg lane width
_SUBLANE = 8     # f32 sublane height


def _round_up(x, m):
    return (x + m - 1) // m * m


# ----------------------------------------------------------------------------
# Per-generation configuration / feature probes
# ----------------------------------------------------------------------------
_CFG = None


def _vmem_config():
    """Per-generation VMEM working-set budget + scoped limit + TC count."""
    global _CFG
    if _CFG is not None:
        return _CFG
    vmem_bytes = None
    try:
        vmem_bytes = int(pltpu.get_tpu_info().vmem_capacity_bytes)
    except Exception:
        vmem_bytes = None
    if vmem_bytes is not None and vmem_bytes >= (100 << 20):
        # v5e / v6e: 128 MiB physical VMEM, single TensorCore per chip.
        _CFG = {"budget": 80 << 20, "limit": 100 << 20, "multi_tc": False}
    else:
        # v7x (64 MiB per TC, 2 TCs) — or unknown: stay conservative.
        _CFG = {"budget": 24 << 20, "limit": 48 << 20, "multi_tc": True}
    return _CFG


_BUFFERED1 = None


def _buffered1_ok():
    """Probe once whether pipeline_mode=pl.Buffered(1) is supported."""
    global _BUFFERED1
    if _BUFFERED1 is not None:
        return _BUFFERED1
    try:
        def _k(x_ref, o_ref):
            o_ref[...] = x_ref[...] + 1.0

        x = jnp.zeros((_SUBLANE, _LANE), jnp.float32)
        y = pl.pallas_call(
            _k,
            out_shape=jax.ShapeDtypeStruct((_SUBLANE, _LANE), jnp.float32),
            grid=(2,),
            in_specs=[pl.BlockSpec((_SUBLANE, _LANE), lambda i: (0, 0),
                                   pipeline_mode=pl.Buffered(1))],
            out_specs=pl.BlockSpec((_SUBLANE, _LANE), lambda i: (0, 0)),
        )(x)
        jax.block_until_ready(y)
        _BUFFERED1 = True
    except Exception:
        _BUFFERED1 = False
    return _BUFFERED1


def _resident_spec(block_shape, index_map):
    """BlockSpec for an input whose block index is constant over the grid:
    single-buffer it when the runtime supports Buffered(1)."""
    if _buffered1_ok():
        return pl.BlockSpec(block_shape, index_map, pipeline_mode=pl.Buffered(1))
    return pl.BlockSpec(block_shape, index_map)


# ----------------------------------------------------------------------------
# Tile-size selection (divisors of the padded width -> grid always covers
# exactly the padded array, never out of bounds)
# ----------------------------------------------------------------------------
def _divisors(n):
    ds = set()
    i = 1
    while i * i <= n:
        if n % i == 0:
            ds.add(i)
            ds.add(n // i)
        i += 1
    return sorted(ds, reverse=True)


def _pick_tiles(n_tiles, cap_tiles, *, want_two_steps):
    cands = [d for d in _divisors(n_tiles) if d <= max(1, cap_tiles)] or [1]
    if want_two_steps and n_tiles >= 2:
        # v7x: keep >= 2 grid steps so the "parallel" axis spans both TCs.
        halved = [d for d in cands if n_tiles // d >= 2]
        if halved:
            cands = halved
    best = cands[0]
    even = [d for d in cands if d % 2 == 0]
    if even and even[0] * 2 >= best:
        best = even[0]   # prefer a 256-lane multiple (fills the MXU RHS)
    return best


def _choose_block_n(m_pad, k, n_pad, out_bytes, cfg):
    n_tiles = n_pad // _LANE
    x_bufs = 1 if _buffered1_ok() else 2
    resident = x_bufs * m_pad * k * 2                       # bf16 activations
    per_tile = _LANE * (2 * k * 2                           # bf16 weight tile
                        + 2 * m_pad * out_bytes             # output tile
                        + 2 * _SUBLANE * 4)                 # bias tile
    cap = max(1, (cfg["budget"] - resident) // per_tile)
    return _pick_tiles(n_tiles, cap, want_two_steps=cfg["multi_tc"]) * _LANE


def _choose_tiles_fused(m_pad, k, f_pad, n_pad, cfg):
    n_tiles = n_pad // _LANE
    f_tiles = f_pad // _LANE
    x_bufs = 1 if _buffered1_ok() else 2
    resident = x_bufs * m_pad * k * 2
    budget = cfg["budget"]

    def cost(bt_n, bt_f):
        bn, bf = bt_n * _LANE, bt_f * _LANE
        return (resident
                + 2 * k * bf * 2              # W1 tile (bf16, double-buffered)
                + 2 * _SUBLANE * bf * 4       # b1 tile
                + 2 * bf * bn * 2             # W2 tile (bf16, double-buffered)
                + 2 * _SUBLANE * bn * 4       # b2 tile
                + 2 * m_pad * bn * 4)         # f32 output tile (accumulator)

    n_cands = _divisors(n_tiles)
    if cfg["multi_tc"] and n_tiles >= 2:
        two = [d for d in n_cands if n_tiles // d >= 2]
        if two:
            n_cands = two
    f_cands = _divisors(f_tiles)
    for bt_n in n_cands:              # widest (lane-dense) output tile first
        for bt_f in f_cands:          # then widest feature tile that fits
            if cost(bt_n, bt_f) <= budget:
                return bt_n * _LANE, bt_f * _LANE
    return _LANE, _LANE


# ----------------------------------------------------------------------------
# Host-side padding / one-time weight preparation
# ----------------------------------------------------------------------------
def _pad_batch(spikes, k_target):
    """Pad/cast activations once: bf16, batch rounded to the sublane, input
    features zero-padded up to the layer's (possibly padded) K."""
    m, k = spikes.shape
    m_pad = _round_up(max(m, _SUBLANE), _SUBLANE)
    x = jnp.asarray(spikes).astype(jnp.bfloat16)
    if m_pad != m or k_target != k:
        x = jnp.pad(x, ((0, m_pad - m), (0, k_target - k)))
    return x, m


def prepare_layer(w_out_in, b, *, k_pad=None):
    """One-time conversion of nn.Linear params (PyTorch (out, in) layout) into
    a kernel-ready (K_pad, N_pad) bf16 weight + (1, N_pad) f32 bias."""
    out_f, in_f = w_out_in.shape
    k = in_f if k_pad is None else max(int(k_pad), in_f)
    n_pad = _round_up(out_f, _LANE)
    w = jnp.zeros((k, n_pad), jnp.bfloat16).at[:in_f, :out_f].set(
        jnp.asarray(w_out_in, jnp.float32).T.astype(jnp.bfloat16))
    bp = jnp.zeros((1, n_pad), jnp.float32).at[0, :out_f].set(
        jnp.asarray(b, jnp.float32))
    return {"w": w, "b": bp, "n_out": int(out_f)}


def prepare_fused(w1_out_in, b1, w2_out_in, b2):
    """One-time prep for the fused feature+output forward."""
    f, k = w1_out_in.shape            # feature layer: (feature, input)
    n, f2 = w2_out_in.shape           # output layer:  (output, feature)
    assert f == f2
    f_pad = _round_up(f, _LANE)
    n_pad = _round_up(n, _LANE)
    w1p = jnp.zeros((k, f_pad), jnp.bfloat16).at[:, :f].set(
        jnp.asarray(w1_out_in, jnp.float32).T.astype(jnp.bfloat16))
    b1p = jnp.zeros((1, f_pad), jnp.float32).at[0, :f].set(
        jnp.asarray(b1, jnp.float32))
    w2p = jnp.zeros((f_pad, n_pad), jnp.bfloat16).at[:f, :n].set(
        jnp.asarray(w2_out_in, jnp.float32).T.astype(jnp.bfloat16))
    b2p = jnp.zeros((1, n_pad), jnp.float32).at[0, :n].set(
        jnp.asarray(b2, jnp.float32))
    return {"w1": w1p, "b1": b1p, "w2": w2p, "b2": b2p, "n_out": int(n)}


def prepare_network(w1, b1, w2, b2):
    """Prepare both layers with chain-consistent padding + the fused params."""
    feature_layer = prepare_layer(w1, b1)
    output_layer = prepare_layer(w2, b2, k_pad=feature_layer["w"].shape[1])
    fused = prepare_fused(w1, b1, w2, b2)
    return feature_layer, output_layer, fused


# ----------------------------------------------------------------------------
# Single-layer linear kernel (module forward: one layer per call)
# ----------------------------------------------------------------------------
def _linear_kernel(x_ref, w_ref, b_ref, o_ref):
    # x: (M, K) bf16, w: (K, bn) bf16, b: (1, bn) f32, o: (M, bn) f32 or bf16
    acc = jnp.dot(x_ref[...], w_ref[...], preferred_element_type=jnp.float32)
    o_ref[...] = (acc + b_ref[...]).astype(o_ref.dtype)


def _linear_padded(x_pad, layer, out_dtype):
    """Run one linear layer on already-padded bf16 activations; returns the
    *padded* (m_pad, n_pad) result in out_dtype (bf16 for chaining)."""
    m_pad, k = x_pad.shape
    w, b = layer["w"], layer["b"]
    assert k == w.shape[0]
    n_pad = w.shape[1]
    cfg = _vmem_config()
    out_bytes = 2 if out_dtype == jnp.bfloat16 else 4
    bn = _choose_block_n(m_pad, k, n_pad, out_bytes, cfg)
    grid = (n_pad // bn,)

    return pl.pallas_call(
        _linear_kernel,
        out_shape=jax.ShapeDtypeStruct((m_pad, n_pad), out_dtype),
        grid_spec=pltpu.PrefetchScalarGridSpec(
            num_scalar_prefetch=0,
            grid=grid,
            in_specs=[
                _resident_spec((m_pad, k), lambda j: (0, 0)),  # activations
                pl.BlockSpec((k, bn), lambda j: (0, j)),       # weight N-tile
                pl.BlockSpec((1, bn), lambda j: (0, j)),       # bias N-tile
            ],
            out_specs=pl.BlockSpec((m_pad, bn), lambda j: (0, j)),
        ),
        compiler_params=pltpu.CompilerParams(
            dimension_semantics=("parallel",),
            vmem_limit_bytes=cfg["limit"],
        ),
        cost_estimate=pl.CostEstimate(
            flops=2 * m_pad * k * n_pad,
            transcendentals=0,
            bytes_accessed=(m_pad * k * 2 + k * n_pad * 2 + n_pad * 4
                            + m_pad * n_pad * out_bytes),
        ),
    )(x_pad, w, b)


def forward(spikes, layer):
    """VPRTempoQuantTrain.forward(spikes, layer): quant -> Linear -> dequant."""
    x, m = _pad_batch(spikes, layer["w"].shape[0])
    y = _linear_padded(x, layer, jnp.float32)
    return y[:m, :layer["n_out"]]


def forward_chain(spikes, layers):
    """Chained per-layer forwards (training passes spikes through prev layers
    then the current one).  Intermediates stay bf16 + lane-padded in HBM — no
    per-layer f32 store / slice / re-pad / re-cast round trip."""
    x, m = _pad_batch(spikes, layers[0]["w"].shape[0])
    for layer in layers[:-1]:
        x = _linear_padded(x, layer, jnp.bfloat16)
    y = _linear_padded(x, layers[-1], jnp.float32)
    return y[:m, :layers[-1]["n_out"]]


# ----------------------------------------------------------------------------
# Fused two-layer kernel (feature layer -> output layer, intermediate in VMEM)
# ----------------------------------------------------------------------------
def _fused_kernel(x_ref, w1_ref, b1_ref, w2_ref, b2_ref, o_ref):
    ki = pl.program_id(1)                     # feature-reduction step

    @pl.when(ki == 0)
    def _():
        o_ref[...] = jnp.zeros_like(o_ref)

    # Feature-layer tile: h = x @ W1[:, tile] + b1[tile]   -> (M, bf) f32
    h = jnp.dot(x_ref[...], w1_ref[...], preferred_element_type=jnp.float32)
    h = h + b1_ref[...]
    # Output-layer partial contraction, accumulated in the resident output.
    o_ref[...] += jnp.dot(h.astype(jnp.bfloat16), w2_ref[...],
                          preferred_element_type=jnp.float32)

    @pl.when(ki == pl.num_programs(1) - 1)
    def _():
        o_ref[...] += b2_ref[...]


def forward_fused(spikes, fused):
    """Feature layer + output layer fused in one pallas_call; intermediate
    feature activations never touch HBM.  Outer grid axis tiles the output
    features ("parallel", shards across v7x's 2 TCs); inner axis is the
    feature-dimension reduction ("arbitrary")."""
    x, m = _pad_batch(spikes, fused["w1"].shape[0])
    m_pad, k = x.shape
    f_pad = fused["w1"].shape[1]
    n_pad = fused["w2"].shape[1]
    cfg = _vmem_config()
    bn, bf = _choose_tiles_fused(m_pad, k, f_pad, n_pad, cfg)
    grid = (n_pad // bn, f_pad // bf)

    y = pl.pallas_call(
        _fused_kernel,
        out_shape=jax.ShapeDtypeStruct((m_pad, n_pad), jnp.float32),
        grid_spec=pltpu.PrefetchScalarGridSpec(
            num_scalar_prefetch=0,
            grid=grid,
            in_specs=[
                _resident_spec((m_pad, k), lambda ni, ki: (0, 0)),  # activations
                pl.BlockSpec((k, bf), lambda ni, ki: (0, ki)),      # W1 feat tile
                pl.BlockSpec((1, bf), lambda ni, ki: (0, ki)),      # b1 feat tile
                pl.BlockSpec((bf, bn), lambda ni, ki: (ki, ni)),    # W2 tile
                pl.BlockSpec((1, bn), lambda ni, ki: (0, ni)),      # b2 N-tile
            ],
            out_specs=pl.BlockSpec((m_pad, bn), lambda ni, ki: (0, ni)),
        ),
        compiler_params=pltpu.CompilerParams(
            dimension_semantics=("parallel", "arbitrary"),
            vmem_limit_bytes=cfg["limit"],
        ),
        cost_estimate=pl.CostEstimate(
            flops=2 * m_pad * k * f_pad + 2 * m_pad * f_pad * n_pad,
            transcendentals=0,
            bytes_accessed=(m_pad * k * 2 + k * f_pad * 2 + f_pad * 4
                            + f_pad * n_pad * 2 + n_pad * 4
                            + m_pad * n_pad * 4),
        ),
    )(x, fused["w1"], fused["b1"], fused["w2"], fused["b2"])
    return y[:m, :fused["n_out"]]


# ----------------------------------------------------------------------------
if __name__ == "__main__":
    # Module-consistent small shapes:
    #   dims = (16, 8) -> input = 128 ; feature = input * 2 = 256
    #   num_places = 20, num_modules = 1 -> output = 20 (exercises lane padding)
    dims = (16, 8)
    input_dim = dims[0] * dims[1]
    feature_dim = input_dim * 2
    output_dim = 20
    batch = 2            # per-step DataLoader batch
    t_chunk = 32         # timestep-batched chunk (amortises weight DMAs)

    key = jax.random.PRNGKey(0)
    k_x, k_t, k_fw, k_fb, k_ow, k_ob = jax.random.split(key, 6)

    # spikes: flattened image intensities in [0, 1]
    spikes = jax.random.uniform(k_x, (batch, input_dim), dtype=jnp.float32)
    spikes_t = jax.random.uniform(k_t, (t_chunk, input_dim), dtype=jnp.float32)

    # nn.Linear-style init, PyTorch (out, in) weight layout.
    bound_f = 1.0 / float(input_dim) ** 0.5
    w1 = jax.random.uniform(k_fw, (feature_dim, input_dim),
                            minval=-bound_f, maxval=bound_f, dtype=jnp.float32)
    b1 = jax.random.uniform(k_fb, (feature_dim,),
                            minval=-bound_f, maxval=bound_f, dtype=jnp.float32)
    bound_o = 1.0 / float(feature_dim) ** 0.5
    w2 = jax.random.uniform(k_ow, (output_dim, feature_dim),
                            minval=-bound_o, maxval=bound_o, dtype=jnp.float32)
    b2 = jax.random.uniform(k_ob, (output_dim,),
                            minval=-bound_o, maxval=bound_o, dtype=jnp.float32)

    # One-time weight prep (layout + bf16 + padding) — NOT in the hot path.
    feature_layer, output_layer, fused = prepare_network(w1, b1, w2, b2)

    # Per-layer forward (module semantics: forward(spikes, layer)).
    feat = forward(spikes, feature_layer)
    out = jax.block_until_ready(forward(feat, output_layer))

    # Chained path: bf16 padded intermediates, no per-layer slice/pad round trip.
    out_chain = jax.block_until_ready(
        forward_chain(spikes, [feature_layer, output_layer]))

    # Fused path on a timestep-batched chunk (intermediate stays in VMEM).
    out_fused = jax.block_until_ready(forward_fused(spikes_t, fused))

    # Pure-JAX references with the same bf16 rounding of inputs/weights.
    w1f = w1.astype(jnp.bfloat16).astype(jnp.float32)
    w2f = w2.astype(jnp.bfloat16).astype(jnp.float32)

    xf = spikes.astype(jnp.bfloat16).astype(jnp.float32)
    ref_feat = xf @ w1f.T + b1
    ref_out = ref_feat.astype(jnp.bfloat16).astype(jnp.float32) @ w2f.T + b2

    xt = spikes_t.astype(jnp.bfloat16).astype(jnp.float32)
    ref_feat_t = xt @ w1f.T + b1
    ref_out_t = ref_feat_t.astype(jnp.bfloat16).astype(jnp.float32) @ w2f.T + b2

    assert out.shape == (batch, output_dim)
    assert out_chain.shape == (batch, output_dim)
    assert out_fused.shape == (t_chunk, output_dim)
    assert jnp.allclose(out, ref_out, atol=1e-2, rtol=1e-2)
    assert jnp.allclose(out_chain, ref_out, atol=1e-2, rtol=1e-2)
    assert jnp.allclose(out_fused, ref_out_t, atol=1e-2, rtol=1e-2)

    print("KERNEL_OK")
</pallas_src>

<mosaic_0001>
module attributes {stable_mosaic.version = 11 : i64} {
  func.func @_k(%arg0: i32, %arg1: memref<8x128xf32, #tpu.memory_space<vmem>>, %arg2: memref<8x128xf32, #tpu.memory_space<vmem>>) attributes {dimension_semantics = [#tpu.dimension_semantics<arbitrary>], iteration_bounds = array<i64: 2>, scalar_prefetch = 0 : i64, scratch_operands = 0 : i64, tpu.core_type = #tpu.core_type<tc>, window_params = [{pipeline_mode = #tpu.pipeline_mode<synchronous>, transform_indices = @transform_0, window_bounds = array<i64: 8, 128>}, {pipeline_mode = #tpu.pipeline_mode<synchronous>, transform_indices = @transform_1, window_bounds = array<i64: 8, 128>}]} {
    %c0 = arith.constant 0 : index
    %c0_0 = arith.constant 0 : index
    %0 = vector.load %arg1[%c0, %c0_0] : memref<8x128xf32, #tpu.memory_space<vmem>>, vector<8x128xf32>
    %cst = arith.constant 1.000000e+00 : f32
    %1 = vector.broadcast %cst : f32 to vector<8x128xf32>
    %2 = arith.addf %0, %1 : vector<8x128xf32>
    %c0_1 = arith.constant 0 : index
    %c0_2 = arith.constant 0 : index
    %3 = vector.load %arg2[%c0_1, %c0_2] : memref<8x128xf32, #tpu.memory_space<vmem>>, vector<8x128xf32>
    tpu.vector_store %arg2[%c0_1, %c0_2], %2 {strides = array<i32>} : memref<8x128xf32, #tpu.memory_space<vmem>>, vector<8x128xf32>,
    return
  }
  func.func @transform_0(%arg0: i32) -> (i32, i32) {
    %c0_i32 = arith.constant 0 : i32
    %c0_i32_0 = arith.constant 0 : i32
    %c0_i32_1 = arith.constant 0 : i32
    return %c0_i32, %c0_i32_0 : i32, i32
  }
  func.func @transform_1(%arg0: i32) -> (i32, i32) {
    %c0_i32 = arith.constant 0 : i32
    %c0_i32_0 = arith.constant 0 : i32
    %c0_i32_1 = arith.constant 0 : i32
    return %c0_i32, %c0_i32_0 : i32, i32
  }
}

module attributes {stable_mosaic.version = 11 : i64} {
  func.func @_linear_kernel(%arg0: i32, %arg1: memref<8x128xbf16, #tpu.memory_space<vmem>>, %arg2: memref<128x128xbf16, #tpu.memory_space<vmem>>, %arg3: memref<1x128xf32, #tpu.memory_space<vmem>>, %arg4: memref<8x128xf32, #tpu.memory_space<vmem>>) attributes {dimension_semantics = [#tpu.dimension_semantics<parallel>], iteration_bounds = array<i64: 2>, scalar_prefetch = 0 : i64, scratch_operands = 0 : i64, tpu.core_type = #tpu.core_type<tc>, window_params = [{pipeline_mode = #tpu.pipeline_mode<synchronous>, transform_indices = @transform_0, window_bounds = array<i64: 8, 128>}, {transform_indices = @transform_1, window_bounds = array<i64: 128, 128>}, {transform_indices = @transform_2, window_bounds = array<i64: 1, 128>}, {transform_indices = @transform_3, window_bounds = array<i64: 8, 128>}]} {
    %c0 = arith.constant 0 : index
    %c0_0 = arith.constant 0 : index
    %0 = vector.load %arg1[%c0, %c0_0] : memref<8x128xbf16, #tpu.memory_space<vmem>>, vector<8x128xbf16>
    %c0_1 = arith.constant 0 : index
    %c0_2 = arith.constant 0 : index
    %1 = vector.load %arg2[%c0_1, %c0_2] : memref<128x128xbf16, #tpu.memory_space<vmem>>, vector<128x128xbf16>
    %cst = arith.constant dense<0.000000e+00> : vector<8x128xf32>
    %2 = tpu.matmul %0, %1, %cst {dimension_numbers = #tpu.dot_dimension_numbers<[1], [0], [0], [1], [0, 0, 1, 1], [], []>} : vector<8x128xbf16>, vector<128x128xbf16>, vector<8x128xf32> -> vector<8x128xf32>
    %c0_3 = arith.constant 0 : index
    %c0_4 = arith.constant 0 : index
    %3 = vector.load %arg3[%c0_3, %c0_4] : memref<1x128xf32, #tpu.memory_space<vmem>>, vector<1x128xf32>
    %4 = vector.broadcast %3 : vector<1x128xf32> to vector<8x128xf32>
    %5 = arith.addf %2, %4 : vector<8x128xf32>
    %c0_5 = arith.constant 0 : index
    %c0_6 = arith.constant 0 : index
    %6 = vector.load %arg4[%c0_5, %c0_6] : memref<8x128xf32, #tpu.memory_space<vmem>>, vector<8x128xf32>
    tpu.vector_store %arg4[%c0_5, %c0_6], %5 {strides = array<i32>} : memref<8x128xf32, #tpu.memory_space<vmem>>, vector<8x128xf32>,
    return
  }
  func.func @transform_0(%arg0: i32) -> (i32, i32) {
    %c0_i32 = arith.constant 0 : i32
    %c0_i32_0 = arith.constant 0 : i32
    %c0_i32_1 = arith.constant 0 : i32
    return %c0_i32, %c0_i32_0 : i32, i32
  }
  func.func @transform_1(%arg0: i32) -> (i32, i32) {
    %c0_i32 = arith.constant 0 : i32
    %c0_i32_0 = arith.constant 0 : i32
    return %c0_i32, %arg0 : i32, i32
  }
  func.func @transform_2(%arg0: i32) -> (i32, i32) {
    %c0_i32 = arith.constant 0 : i32
    %c0_i32_0 = arith.constant 0 : i32
    return %c0_i32, %arg0 : i32, i32
  }
  func.func @transform_3(%arg0: i32) -> (i32, i32) {
    %c0_i32 = arith.constant 0 : i32
    %c0_i32_0 = arith.constant 0 : i32
    return %c0_i32, %arg0 : i32, i32
  }
}

</mosaic_0001>

<llo_original>
// kernel: tpu_custom_call.1
$region0: #{tpu_custom_call.1}
  #allocation0 [shape = 'u32[]', space=smem, size = 0x4, offset = 0x4, fixed_abs, tag = 'smem constant byte address 0x4 - core index']
  #allocation1 [shape = 'u32[144,128]{1,0:T(1,128)}', space=vmem, size = 0x12000, scoped, tag = 'internal scratch']
  %s0 = inlined_call_operand.hbm [shape: f32[8,128], index: 0, kind: input, shape index: {}]
  %s1 = inlined_call_operand.hbm [shape: f32[8,128], index: 1, kind: output, shape index: {}]
  %s2 = sld [smem:[#allocation0]]
  $region41: #{tpu_custom_call.1} parent=0
    _
  %s4 = ssub.s32 1, %s2
  %s5 = scalar_select 0, %s4, %s2
  $region1: #{tpu_custom_call.1} parent=0
    #allocation2 [shape = 'u8[4096]{0}', space=vmem, size = 0x1000, scoped, tag = 'input window, operand 0, single buffered']
    #allocation3 [shape = 's32[2]{0}', space=sflag, size = 0x8, scoped, tag = 'scoped memory for tpu_custom_call.1']
    #allocation4 [shape = 's32[2]{0}', space=sflag, size = 0x8, scoped, tag = 'scoped memory for tpu_custom_call.1']
    #allocation5 [shape = 'u8[4096]{0}', space=vmem, size = 0x1000, scoped, tag = 'output window, operand 0, single buffered']
    %6 = vsyncpa [#allocation3], 0
    %7 = vsyncpa [#allocation4], 0
    loop: start=0, step=1, limit=4
    $region2: #{tpu_custom_call.1} parent=1 // loop_pre_header
      _
    $region3: #{tpu_custom_call.1} parent=1 // loop_header
      %s9 = sphi 0, %s13
      %p10 = scmp.ge.s32.totalorder %s9, 4
      %s17 = sphi 0, %s17
      %s19 = sphi 0, %s17
      %s20 = sphi 0, %s19
      %s34 = sphi 0, %s20
      %s38 = sphi 0, %s38
      %s40 = sphi 0, %s38
      %s41 = sphi 0, %s40
      %s55 = sphi 0, %s41
    $region4: #{tpu_custom_call.1} parent=1 // loop_header_branch
      %12 = sbr.rel (%p10) target = $region8
    $region5: #{tpu_custom_call.1} parent=1 // loop_body
      %s14 = ssub.s32 %s9, 1
      %s15 = ssub.s32 %s9, 2
      %s16 = sadd.s32 %s9, 1
      %s18 = sadd.s32 %s17, 1
      %p21 = scmp.eq.s32.totalorder %s9, 1
      %p22 = scmp.ne.s32.totalorder %s17, %s19
      %p23 = scmp.eq.s32.totalorder %s9, 0
      %p24 = por %p22, %p23
      %p25 = scmp.ne.s32.totalorder %s17, %s19
      %p26 = scmp.eq.s32.totalorder %s14, 1
      %p27 = por %p25, %p26
      %p28 = scmp.ne.s32.totalorder %s19, %s20
      %p29 = scmp.eq.s32.totalorder %s14, 0
      %p30 = por %p28, %p29
      %p31 = scmp.ne.s32.totalorder %s19, %s20
      %p32 = scmp.eq.s32.totalorder %s15, 1
      %p33 = por %p31, %p32
      %p35 = scmp.ne.s32.totalorder %s20, %s34
      %p36 = scmp.eq.s32.totalorder %s15, 0
      %p37 = por %p35, %p36
      %s39 = sadd.s32 %s38, 1
      %p42 = scmp.eq.s32.totalorder %s9, 1
      %p43 = scmp.ne.s32.totalorder %s38, %s40
      %p44 = scmp.eq.s32.totalorder %s9, 0
      %p45 = por %p43, %p44
      %p46 = scmp.ne.s32.totalorder %s38, %s40
      %p47 = scmp.eq.s32.totalorder %s14, 1
      %p48 = por %p46, %p47
      %p49 = scmp.ne.s32.totalorder %s40, %s41
      %p50 = scmp.eq.s32.totalorder %s14, 0
      %p51 = por %p49, %p50
      %p52 = scmp.ne.s32.totalorder %s40, %s41
      %p53 = scmp.eq.s32.totalorder %s15, 1
      %p54 = por %p52, %p53
      %p56 = scmp.ne.s32.totalorder %s41, %s55
      %p57 = scmp.eq.s32.totalorder %s15, 0
      %p58 = por %p56, %p57
      %p59 = scmp.le.s32.totalorder 1, %s9
      %p60 = scmp.lt.s32.totalorder %s9, 3
      %p61 = pnand %p59, %p60
      %p62 = pneg %p61
      // Predicated region
      $region9: #{tpu_custom_call.1} parent=5 // pred_check
        _
      $region10: #{tpu_custom_call.1} parent=5 // pred_check_branch
        %64 = sbr.rel (%p61) target = $region12
      $region11: #{tpu_custom_call.1} parent=5 // pred_region
        %s65 = ssub.s32 %s9, 1
        // Predicated region
        $region13: #{tpu_custom_call.1} parent=11 // pred_check
          %p66 = pneg %p30
        $region14: #{tpu_custom_call.1} parent=11 // pred_check_branch
          %68 = sbr.rel (%p66) target = $region16
        $region15: #{tpu_custom_call.1} parent=11 // pred_region
          %s70 = ssub.s32 128, 128
          %71 = vsyncadd [#allocation3], %s70
          %s73 = sshll.u32 [#allocation2], 4
          %s74 = int_to_ptr.vmem [resolvable:$true] %s73
          %76 = dma.hbm_to_vmem [thread:$0]  %s0, 128, %s74, [#allocation3]
        $region16: #{tpu_custom_call.1} parent=11 // pred_fallthru
          _
      $region12: #{tpu_custom_call.1} parent=5 // pred_fallthru
        _
      %p77 = scmp.lt.s32.totalorder %s9, 2
      // Predicated region
      $region17: #{tpu_custom_call.1} parent=5 // pred_check
        %p78 = pneg %p77
      $region18: #{tpu_custom_call.1} parent=5 // pred_check_branch
        %80 = sbr.rel (%p78) target = $region20
      $region19: #{tpu_custom_call.1} parent=5 // pred_region
        _
      $region20: #{tpu_custom_call.1} parent=5 // pred_fallthru
        _
      %p81 = scmp.le.s32.totalorder 1, %s9
      %p82 = scmp.lt.s32.totalorder %s9, 3
      %p83 = pnand %p81, %p82
      %p84 = pneg %p83
      // Predicated region
      $region21: #{tpu_custom_call.1} parent=5 // pred_check
        _
      $region22: #{tpu_custom_call.1} parent=5 // pred_check_branch
        %86 = sbr.rel (%p83) target = $region24
      $region23: #{tpu_custom_call.1} parent=5 // pred_region
        %s87 = ssub.s32 %s9, 1
        // Predicated region
        $region25: #{tpu_custom_call.1} parent=23 // pred_check
          %p88 = pneg %p30
        $region26: #{tpu_custom_call.1} parent=23 // pred_check_branch
          %90 = sbr.rel (%p88) target = $region28
        $region27: #{tpu_custom_call.1} parent=23 // pred_region
          %91 = dma.done [#allocation3], 128
        $region28: #{tpu_custom_call.1} parent=23 // pred_fallthru
          _
        %p92 = pneg %p30
        %p93 = pneg %p27
        %p94 = pneg %p51
        %p95 = pneg %p48
        %v96 = vld [vmem:[#allocation2] sm:$0xff]
        %v97 = vadd.f32 %v96, 1.0
        %98 = vst [vmem:[#allocation5] sm:$0xff] %v97
        // Predicated region
        $region29: #{tpu_custom_call.1} parent=23 // pred_check
          %p99 = pneg %p48
        $region30: #{tpu_custom_call.1} parent=23 // pred_check_branch
          %101 = sbr.rel (%p99) target = $region32
        $region31: #{tpu_custom_call.1} parent=23 // pred_region
          %s103 = ssub.s32 128, 128
          %104 = vsyncadd [#allocation4], %s103
          %s106 = sshll.u32 [#allocation5], 4
          %s107 = int_to_ptr.vmem [resolvable:$true] %s106
          %109 = dma.vmem_to_hbm [thread:$0]  %s107, 128, %s1, [#allocation4]
        $region32: #{tpu_custom_call.1} parent=23 // pred_fallthru
          _
        // Predicated region
        $region33: #{tpu_custom_call.1} parent=23 // pred_check
          %p110 = pneg %p48
        $region34: #{tpu_custom_call.1} parent=23 // pred_check_branch
          %112 = sbr.rel (%p110) target = $region36
        $region35: #{tpu_custom_call.1} parent=23 // pred_region
          %113 = dma.done [#allocation4], 128
        $region36: #{tpu_custom_call.1} parent=23 // pred_fallthru
          _
      $region24: #{tpu_custom_call.1} parent=5 // pred_fallthru
        _
      %p114 = scmp.le.s32.totalorder 2, %s9
      // Predicated region
      $region37: #{tpu_custom_call.1} parent=5 // pred_check
        %p115 = pneg %p114
      $region38: #{tpu_custom_call.1} parent=5 // pred_check_branch
        %117 = sbr.rel (%p115) target = $region40
      $region39: #{tpu_custom_call.1} parent=5 // pred_region
        %s118 = ssub.s32 %s9, 2
      $region40: #{tpu_custom_call.1} parent=5 // pred_fallthru
        _
    $region6: #{tpu_custom_call.1} parent=1 // loop_footer
      %s13 = sadd.s32 1, %s9
    $region7: #{tpu_custom_call.1} parent=1 // loop_footer_branch
      %8 = sbr.rel target = $region3
    $region8: #{tpu_custom_call.1} parent=1 // loop_exit
      _
    %119 = vsyncpa [#allocation3], 1
    %s120 = scalar_lea.sflag [#allocation3], 1
    %121 = vsyncpa %s120, 1
    %122 = vsyncpa [#allocation4], 1
    %s123 = scalar_lea.sflag [#allocation4], 1
    %124 = vsyncpa %s123, 1

// kernel: tpu_custom_call.1
$region0: #{tpu_custom_call.1}
  #allocation0 [shape = 'u32[]', space=smem, size = 0x4, offset = 0x4, fixed_abs, tag = 'smem constant byte address 0x4 - core index']
  #allocation1 [shape = 'u32[144,128]{1,0:T(1,128)}', space=vmem, size = 0x12000, scoped, tag = 'internal scratch']
  %s0 = inlined_call_operand.hbm [shape: bf16[8,128], index: 0, kind: input, shape index: {}]
  %s1 = inlined_call_operand.hbm [shape: bf16[128,256], index: 1, kind: input, shape index: {}]
  %s2 = inlined_call_operand.vmem [shape: f32[1,256], index: 2, kind: input, shape index: {}]
  %s3 = inlined_call_operand.hbm [shape: f32[8,256], index: 3, kind: output, shape index: {}]
  %s4 = sld [smem:[#allocation0]]
  $region53: #{tpu_custom_call.1} parent=0
    _
  %s6 = ssub.s32 1, %s4
  %s7 = scalar_select 0, %s6, %s4
  $region1: #{tpu_custom_call.1} parent=0
    #allocation2 [shape = 'u8[2048]{0}', space=vmem, size = 0x800, scoped, tag = 'input window, operand 0, single buffered']
    #allocation3 [shape = 's32[2]{0}', space=sflag, size = 0x8, scoped, tag = 'scoped memory for tpu_custom_call.1']
    #allocation4 [shape = 's32[2]{0}', space=sflag, size = 0x8, scoped, tag = 'scoped memory for tpu_custom_call.1']
    #allocation5 [shape = 'u8[65536]{0}', space=vmem, size = 0x10000, scoped, tag = 'input window, operand 1']
    #allocation6 [shape = 's32[2]{0}', space=sflag, size = 0x8, scoped, tag = 'scoped memory for tpu_custom_call.1']
    #allocation7 [shape = 'u8[8192]{0}', space=vmem, size = 0x2000, scoped, tag = 'output window, operand 0']
    %8 = vsyncpa [#allocation3], 0
    %9 = vsyncpa [#allocation6], 0
    %s10 = scalar_lea.sflag [#allocation6], 1
    %11 = vsyncpa %s10, 0
    %12 = vsyncpa [#allocation4], 0
    %s13 = scalar_lea.sflag [#allocation4], 1
    %14 = vsyncpa %s13, 0
    loop: start=0, step=1, limit=4
    $region2: #{tpu_custom_call.1} parent=1 // loop_pre_header
      _
    $region3: #{tpu_custom_call.1} parent=1 // loop_header
      %s16 = sphi 0, %s20
      %p17 = scmp.ge.s32.totalorder %s16, 4
      %s24 = sphi 0, %s24
      %s26 = sphi 0, %s24
      %s27 = sphi 0, %s26
      %s41 = sphi 0, %s27
      %s47 = sphi 0, %s49
      %s50 = sphi 0, %s47
      %s51 = sphi 0, %s50
      %s67 = sphi 0, %s51
      %s73 = sphi 0, %s75
      %s76 = sphi 0, %s73
      %s77 = sphi 0, %s76
      %s93 = sphi 0, %s77
      %s99 = sphi 0, %s101
      %s102 = sphi 0, %s99
      %s103 = sphi 0, %s102
      %s119 = sphi 0, %s103
    $region4: #{tpu_custom_call.1} parent=1 // loop_header_branch
      %19 = sbr.rel (%p17) target = $region8
    $region5: #{tpu_custom_call.1} parent=1 // loop_body
      %s21 = ssub.s32 %s16, 1
      %s22 = ssub.s32 %s16, 2
      %s23 = sadd.s32 %s16, 1
      %s25 = sadd.s32 %s24, 1
      %p28 = scmp.eq.s32.totalorder %s16, 1
      %p29 = scmp.ne.s32.totalorder %s24, %s26
      %p30 = scmp.eq.s32.totalorder %s16, 0
      %p31 = por %p29, %p30
      %p32 = scmp.ne.s32.totalorder %s24, %s26
      %p33 = scmp.eq.s32.totalorder %s21, 1
      %p34 = por %p32, %p33
      %p35 = scmp.ne.s32.totalorder %s26, %s27
      %p36 = scmp.eq.s32.totalorder %s21, 0
      %p37 = por %p35, %p36
      %p38 = scmp.ne.s32.totalorder %s26, %s27
      %p39 = scmp.eq.s32.totalorder %s22, 1
      %p40 = por %p38, %p39
      %p42 = scmp.ne.s32.totalorder %s27, %s41
      %p43 = scmp.eq.s32.totalorder %s22, 0
      %p44 = por %p42, %p43
      %s45 = ssub.s32 %s16, %s23
      %p46 = scmp.eq.s32.totalorder %s45, 0
      %s48 = sadd.s32 %s47, 1
      %s49 = scalar_select %p46, %s47, %s48
      %p52 = pneg %p46
      %p53 = scmp.eq.s32.totalorder %s16, 1
      %p54 = por %p52, %p53
      %p55 = scmp.ne.s32.totalorder %s47, %s50
      %p56 = scmp.eq.s32.totalorder %s16, 0
      %p57 = por %p55, %p56
      %p58 = scmp.ne.s32.totalorder %s47, %s50
      %p59 = scmp.eq.s32.totalorder %s21, 1
      %p60 = por %p58, %p59
      %p61 = scmp.ne.s32.totalorder %s50, %s51
      %p62 = scmp.eq.s32.totalorder %s21, 0
      %p63 = por %p61, %p62
      %p64 = scmp.ne.s32.totalorder %s50, %s51
      %p65 = scmp.eq.s32.totalorder %s22, 1
      %p66 = por %p64, %p65
      %p68 = scmp.ne.s32.totalorder %s51, %s67
      %p69 = scmp.eq.s32.totalorder %s22, 0
      %p70 = por %p68, %p69
      %s71 = ssub.s32 %s16, %s23
      %p72 = scmp.eq.s32.totalorder %s71, 0
      %s74 = sadd.s32 %s73, 1
      %s75 = scalar_select %p72, %s73, %s74
      %p78 = pneg %p72
      %p79 = scmp.eq.s32.totalorder %s16, 1
      %p80 = por %p78, %p79
      %p81 = scmp.ne.s32.totalorder %s73, %s76
      %p82 = scmp.eq.s32.totalorder %s16, 0
      %p83 = por %p81, %p82
      %p84 = scmp.ne.s32.totalorder %s73, %s76
      %p85 = scmp.eq.s32.totalorder %s21, 1
      %p86 = por %p84, %p85
      %p87 = scmp.ne.s32.totalorder %s76, %s77
      %p88 = scmp.eq.s32.totalorder %s21, 0
      %p89 = por %p87, %p88
      %p90 = scmp.ne.s32.totalorder %s76, %s77
      %p91 = scmp.eq.s32.totalorder %s22, 1
      %p92 = por %p90, %p91
      %p94 = scmp.ne.s32.totalorder %s77, %s93
      %p95 = scmp.eq.s32.totalorder %s22, 0
      %p96 = por %p94, %p95
      %s97 = ssub.s32 %s16, %s23
      %p98 = scmp.eq.s32.totalorder %s97, 0
      %s100 = sadd.s32 %s99, 1
      %s101 = scalar_select %p98, %s99, %s100
      %p104 = pneg %p98
      %p105 = scmp.eq.s32.totalorder %s16, 1
      %p106 = por %p104, %p105
      %p107 = scmp.ne.s32.totalorder %s99, %s102
      %p108 = scmp.eq.s32.totalorder %s16, 0
      %p109 = por %p107, %p108
      %p110 = scmp.ne.s32.totalorder %s99, %s102
      %p111 = scmp.eq.s32.totalorder %s21, 1
      %p112 = por %p110, %p111
      %p113 = scmp.ne.s32.totalorder %s102, %s103
      %p114 = scmp.eq.s32.totalorder %s21, 0
      %p115 = por %p113, %p114
      %p116 = scmp.ne.s32.totalorder %s102, %s103
      %p117 = scmp.eq.s32.totalorder %s22, 1
      %p118 = por %p116, %p117
      %p120 = scmp.ne.s32.totalorder %s103, %s119
      %p121 = scmp.eq.s32.totalorder %s22, 0
      %p122 = por %p120, %p121
      %p123 = scmp.le.s32.totalorder 1, %s16
      %p124 = scmp.lt.s32.totalorder %s16, 3
      %p125 = pnand %p123, %p124
      %p126 = pneg %p125
      // Predicated region
      $region9: #{tpu_custom_call.1} parent=5 // pred_check
        _
      $region10: #{tpu_custom_call.1} parent=5 // pred_check_branch
        %128 = sbr.rel (%p125) target = $region12
      $region11: #{tpu_custom_call.1} parent=5 // pred_region
        %s129 = ssub.s32 %s16, 1
        // Predicated region
        $region13: #{tpu_custom_call.1} parent=11 // pred_check
          %p130 = pneg %p37
        $region14: #{tpu_custom_call.1} parent=11 // pred_check_branch
          %132 = sbr.rel (%p130) target = $region16
        $region15: #{tpu_custom_call.1} parent=11 // pred_region
          %s134 = ssub.s32 64, 64
          %135 = vsyncadd [#allocation3], %s134
          %s137 = sshll.u32 [#allocation2], 4
          %s138 = int_to_ptr.vmem [resolvable:$true] %s137
          %140 = dma.hbm_to_vmem [thread:$0]  %s0, 64, %s138, [#allocation3]
        $region16: #{tpu_custom_call.1} parent=11 // pred_fallthru
          _
      $region12: #{tpu_custom_call.1} parent=5 // pred_fallthru
        _
      %p141 = scmp.lt.s32.totalorder %s16, 2
      // Predicated region
      $region17: #{tpu_custom_call.1} parent=5 // pred_check
        %p142 = pneg %p141
      $region18: #{tpu_custom_call.1} parent=5 // pred_check_branch
        %144 = sbr.rel (%p142) target = $region20
      $region19: #{tpu_custom_call.1} parent=5 // pred_region
        // Predicated region
        $region21: #{tpu_custom_call.1} parent=19 // pred_check
          %p145 = pneg %p57
        $region22: #{tpu_custom_call.1} parent=19 // pred_check_branch
          %147 = sbr.rel (%p145) target = $region24
        $region23: #{tpu_custom_call.1} parent=19 // pred_region
          %s148 = sand.u32 %s47, 1
          %s149 = scalar_lea.sflag [#allocation6], %s148
          %s150 = sand.u32 %s47, 1
          %s151 = smul.addr %s150, 64
          %s152 = scalar_lea.vmem [#allocation5], %s151
          %s154 = ssub.s32 1024, 1024
          %155 = vsyncadd %s149, %s154
          %s156 = smul.addr %s16, 64
          %s157 = scalar_lea.hbm %s1, %s156
          %s158 = sshll.u32 %s152, 4
          %s159 = int_to_ptr.vmem [resolvable:$true] %s158
          %164 = dma.hbm_to_vmem [thread:$0]  %s157, 1024, %s159, %s149, 128, 64, 4
        $region24: #{tpu_custom_call.1} parent=19 // pred_fallthru
          _
        // Predicated region
        $region25: #{tpu_custom_call.1} parent=19 // pred_check
          %p165 = pneg %p83
        $region26: #{tpu_custom_call.1} parent=19 // pred_check_branch
          %167 = sbr.rel (%p165) target = $region28
        $region27: #{tpu_custom_call.1} parent=19 // pred_region
          %p168 = scmp.lt.s32.totalorder %s16, 1
          %s169 = scalar_select %p168, %s16, 1
          %s170 = scalar_lea.vmem %s2, %s169
        $region28: #{tpu_custom_call.1} parent=19 // pred_fallthru
          _
      $region20: #{tpu_custom_call.1} parent=5 // pred_fallthru
        _
      %p171 = scmp.le.s32.totalorder 1, %s16
      %p172 = scmp.lt.s32.totalorder %s16, 3
      %p173 = pnand %p171, %p172
      %p174 = pneg %p173
      // Predicated region
      $region29: #{tpu_custom_call.1} parent=5 // pred_check
        _
      $region30: #{tpu_custom_call.1} parent=5 // pred_check_branch
        %176 = sbr.rel (%p173) target = $region32
      $region31: #{tpu_custom_call.1} parent=5 // pred_region
        %s177 = ssub.s32 %s16, 1
        // Predicated region
        $region33: #{tpu_custom_call.1} parent=31 // pred_check
          %p178 = pneg %p37
        $region34: #{tpu_custom_call.1} parent=31 // pred_check_branch
          %180 = sbr.rel (%p178) target = $region36
        $region35: #{tpu_custom_call.1} parent=31 // pred_region
          %181 = dma.done [#allocation3], 64
        $region36: #{tpu_custom_call.1} parent=31 // pred_fallthru
          _
        %s182 = sand.u32 %s50, 1
        %s183 = scalar_lea.sflag [#allocation6], %s182
        %s184 = sand.u32 %s50, 1
        %s185 = smul.addr %s184, 64
        %s186 = scalar_lea.vmem [#allocation5], %s185
        // Predicated region
        $region37: #{tpu_custom_call.1} parent=31 // pred_check
          %p187 = pneg %p63
        $region38: #{tpu_custom_call.1} parent=31 // pred_check_branch
          %189 = sbr.rel (%p187) target = $region40
        $region39: #{tpu_custom_call.1} parent=31 // pred_region
          %190 = dma.done %s183, 1024
        $region40: #{tpu_custom_call.1} parent=31 // pred_fallthru
          _
        %p191 = pneg %p37
        %p192 = pneg %p34
        %s193 = sand.u32 %s50, 1
        %s194 = scalar_lea.sflag [#allocation6], %s193
        %s195 = sand.u32 %s50, 1
        %s196 = smul.addr %s195, 64
        %s197 = scalar_lea.vmem [#allocation5], %s196
        %p198 = pneg %p63
        %p199 = pneg %p60
        %p200 = scmp.lt.s32.totalorder %s21, 1
        %s201 = scalar_select %p200, %s21, 1
        %s202 = scalar_lea.vmem %s2, %s201
        %p203 = pneg %p89
        %p204 = pneg %p86
        %p205 = pneg %p115
        %p206 = pneg %p112
        %s207 = sand.u32 %s102, 1
        %s208 = scalar_lea.sflag [#allocation4], %s207
        %s209 = sand.u32 %s102, 1
        %s210 = smul.addr %s209, 8
        %s211 = scalar_lea.vmem [#allocation7], %s210
        %p212 = scmp.lt.s32.totalorder %s21, 1
        %s213 = scalar_select %p212, %s21, 1
        %s214 = scalar_lea.vmem %s2, %s213
        %v216 = vld [vmem:[#allocation2] sm:$0xf]
        %v217 = vld [vmem:[%s186] sm:$0xf]
        %v218 = vld [vmem:[%s186 + $0x4] sm:$0xf]
        %v219 = vld [vmem:[%s186 + $0x8] sm:$0xf]
        %v220 = vld [vmem:[%s186 + $0xc] sm:$0xf]
        %v221 = vld [vmem:[%s186 + $0x10] sm:$0xf]
        %v222 = vld [vmem:[%s186 + $0x14] sm:$0xf]
        %v223 = vld [vmem:[%s186 + $0x18] sm:$0xf]
        %v224 = vld [vmem:[%s186 + $0x1c] sm:$0xf]
        %v225 = vld [vmem:[%s186 + $0x20] sm:$0xf]
        %v226 = vld [vmem:[%s186 + $0x24] sm:$0xf]
        %v227 = vld [vmem:[%s186 + $0x28] sm:$0xf]
        %v228 = vld [vmem:[%s186 + $0x2c] sm:$0xf]
        %v229 = vld [vmem:[%s186 + $0x30] sm:$0xf]
        %v230 = vld [vmem:[%s186 + $0x34] sm:$0xf]
        %v231 = vld [vmem:[%s186 + $0x38] sm:$0xf]
        %v232 = vld [vmem:[%s186 + $0x3c] sm:$0xf]
        %v233 = vld [vmem:[%s214] sm:$0x1]
        %v235 = vlaneseq
        %v236 = vshrl.u32 %v235, 7
        %v237 = vsub.s32 0, %v236
        %v238 = vrot.slane %v233, %v237
        %v256 = vunpack.c.l.b16 %v217
        %v257 = vunpack.c.l.b16 %v218
        %v258 = vunpack.c.l.b16 %v219
        %v259 = vunpack.c.l.b16 %v220
        %v260 = vunpack.c.l.b16 %v221
        %v261 = vunpack.c.l.b16 %v222
        %v262 = vunpack.c.l.b16 %v223
        %v263 = vunpack.c.l.b16 %v224
        %v264 = vunpack.c.l.b16 %v225
        %v265 = vunpack.c.l.b16 %v226
        %v266 = vunpack.c.l.b16 %v227
        %v267 = vunpack.c.l.b16 %v228
        %v268 = vunpack.c.l.b16 %v229
        %v269 = vunpack.c.l.b16 %v230
        %v270 = vunpack.c.l.b16 %v231
        %v271 = vunpack.c.l.b16 %v232
        %v272 = vpack.c.b16 %v257, %v256
        %v273 = vpack.c.b16 %v259, %v258
        %v274 = vpack.c.b16 %v261, %v260
        %v275 = vpack.c.b16 %v263, %v262
        %v276 = vpack.c.b16 %v265, %v264
        %v277 = vpack.c.b16 %v267, %v266
        %v278 = vpack.c.b16 %v269, %v268
        %v279 = vpack.c.b16 %v271, %v270
        %288 = vmatprep.subr.bf16.mxu0 0
        %289 = vmatpush1.bf16.msra.mxu0 %v272
        %290 = vmatprep.subr.bf16.mxu0 0
        %291 = vmatpush1.bf16.msra.mxu0 %v273
        %292 = vmatprep.subr.bf16.mxu0 0
        %293 = vmatpush1.bf16.msra.mxu0 %v274
        %294 = vmatprep.subr.bf16.mxu0 0
        %295 = vmatpush1.bf16.msra.mxu0 %v275
        %296 = vmatprep.subr.bf16.mxu0 0
        %297 = vmatpush1.bf16.msra.mxu0 %v276
        %298 = vmatprep.subr.bf16.mxu0 0
        %299 = vmatpush1.bf16.msra.mxu0 %v277
        %300 = vmatprep.subr.bf16.mxu0 0
        %301 = vmatpush1.bf16.msra.mxu0 %v278
        %302 = vmatprep.subr.bf16.mxu0 0
        %303 = vmatpush1.bf16.msra.mxu0 %v279
        %304 = vmatprep.subr.bf16.mxu0 0
        %305 = vmatpush1.bf16.msra.mxu0 0
        %306 = vmatprep.subr.bf16.mxu0 0
        %307 = vmatpush1.bf16.msra.mxu0 0
        %308 = vmatprep.subr.bf16.mxu0 0
        %309 = vmatpush1.bf16.msra.mxu0 0
        %310 = vmatprep.subr.bf16.mxu0 0
        %311 = vmatpush1.bf16.msra.mxu0 0
        %312 = vmatprep.subr.bf16.mxu0 0
        %313 = vmatpush1.bf16.msra.mxu0 0
        %314 = vmatprep.subr.bf16.mxu0 0
        %315 = vmatpush1.bf16.msra.mxu0 0
        %316 = vmatprep.subr.bf16.mxu0 0
        %317 = vmatpush1.bf16.msra.mxu0 0
        %318 = vmatprep.subr.bf16.mxu0 0
        %319 = vmatpush1.bf16.msra.mxu0 0
        %320 = vmatprep.mubr.bf16.mxu0 0
        %321 = vmatmul.mubr.bf16.gmra.mrb[0].mxu0 %v216
        %v322 = vpop.f32.mrb[0].mxu0
        %v323 = vadd.f32 %v238, %v322
        %v324 = vpop.f32.mrb[0].mxu0
        %v325 = vpop.f32.mrb[0].mxu0
        %v326 = vpop.f32.mrb[0].mxu0
        %327 = vdwg.mxu0
        %328 = vst [vmem:[%s211] sm:$0xff] %v323
        %s329 = sand.u32 %s102, 1
        %s330 = scalar_lea.sflag [#allocation4], %s329
        %s331 = sand.u32 %s102, 1
        %s332 = smul.addr %s331, 8
        %s333 = scalar_lea.vmem [#allocation7], %s332
        // Predicated region
        $region41: #{tpu_custom_call.1} parent=31 // pred_check
          %p334 = pneg %p112
        $region42: #{tpu_custom_call.1} parent=31 // pred_check_branch
          %336 = sbr.rel (%p334) target = $region44
        $region43: #{tpu_custom_call.1} parent=31 // pred_region
          %s338 = ssub.s32 128, 128
          %339 = vsyncadd %s330, %s338
          %s340 = smul.addr %s21, 128
          %s341 = scalar_lea.hbm %s3, %s340
          %s343 = sshll.u32 %s333, 4
          %s344 = int_to_ptr.vmem [resolvable:$true] %s343
          %346 = dma.vmem_to_hbm [thread:$0]  %s344, 128, %s341, %s330
        $region44: #{tpu_custom_call.1} parent=31 // pred_fallthru
          _
      $region32: #{tpu_custom_call.1} parent=5 // pred_fallthru
        _
      %p347 = scmp.le.s32.totalorder 2, %s16
      // Predicated region
      $region45: #{tpu_custom_call.1} parent=5 // pred_check
        %p348 = pneg %p347
      $region46: #{tpu_custom_call.1} parent=5 // pred_check_branch
        %350 = sbr.rel (%p348) target = $region48
      $region47: #{tpu_custom_call.1} parent=5 // pred_region
        %s351 = ssub.s32 %s16, 2
        // Predicated region
        $region49: #{tpu_custom_call.1} parent=47 // pred_check
          %p352 = pneg %p118
        $region50: #{tpu_custom_call.1} parent=47 // pred_check_branch
          %354 = sbr.rel (%p352) target = $region52
        $region51: #{tpu_custom_call.1} parent=47 // pred_region
          %s355 = sand.u32 %s103, 1
          %s356 = scalar_lea.sflag [#allocation4], %s355
          %s357 = sand.u32 %s103, 1
          %s358 = smul.addr %s357, 8
          %s359 = scalar_lea.vmem [#allocation7], %s358
          %360 = dma.done %s356, 128
        $region52: #{tpu_custom_call.1} parent=47 // pred_fallthru
          _
      $region48: #{tpu_custom_call.1} parent=5 // pred_fallthru
        _
    $region6: #{tpu_custom_call.1} parent=1 // loop_footer
      %s20 = sadd.s32 1, %s16
    $region7: #{tpu_custom_call.1} parent=1 // loop_footer_branch
      %15 = sbr.rel target = $region3
    $region8: #{tpu_custom_call.1} parent=1 // loop_exit
      _
    %361 = vsyncpa [#allocation3], 1
    %s362 = scalar_lea.sflag [#allocation3], 1
    %363 = vsyncpa %s362, 1
    %364 = vsyncpa [#allocation6], 1
    %s365 = scalar_lea.sflag [#allocation6], 1
    %366 = vsyncpa %s365, 1
    %367 = vsyncpa [#allocation4], 1
    %s368 = scalar_lea.sflag [#allocation4], 1
    %369 = vsyncpa %s368, 1

</llo_original>
